<compile_context>
chip_gen: v6e
topology: v6e:2x2x1
jax: 0.10.0
libtpu: 0.0.40
codegen_flags: <defaults>
</compile_context>

<pallas_src>
import jax
import jax.numpy as jnp
from jax.experimental import pallas as pl
from jax.experimental.pallas import tpu as pltpu

_EPS = 1e-16


def _isru_hf_kernel(x_ref, o_ref):
    """x_ref / o_ref: (tm, L) VMEM tiles; elementwise ISRU_Hf, f32 compute."""
    x = x_ref[...].astype(jnp.float32)
    # torch.clamp(x, eps, 1 - eps); in f32 the upper bound rounds to 1.0,
    # matching the PyTorch module's f32 behavior.
    x = jnp.clip(x, _EPS, 1.0 - _EPS)
    u = 2.0 * x - 1.0
    y = u * jax.lax.rsqrt(1.0 - u * u + _EPS)
    o_ref[...] = y.astype(o_ref.dtype)


def _round_up(n, m):
    return ((n + m - 1) // m) * m


def isru_hf(x, *, rows_per_tile=512):
    """Elementwise ISRU_Hf on an arbitrary-shaped array.

    The array is viewed as (rows, L) with L a multiple of 128 (lane-dense,
    unmasked full-width stores) and tiled over rows.  Padding is only used
    when the element count is not a multiple of 128.
    """
    orig_shape = x.shape
    dtype = x.dtype
    n = x.size
    if n == 0:
        return x

    # Sublane multiple is dtype-dependent (packed sublanes for narrow dtypes).
    itemsize = jnp.dtype(dtype).itemsize
    sub = {4: 8, 2: 16, 1: 32}.get(itemsize, 8)

    # Pick the largest lane width (multiple of 128, <= 1024) that divides n
    # exactly so the reshape is free; otherwise fall back to pad + slice.
    L = None
    for cand in (1024, 512, 256, 128):
        if n % cand == 0:
            L = cand
            break

    if L is not None:
        rows = n // L
        x2 = x.reshape(rows, L)          # contiguous reshape: no HBM copy
        padded = False
    else:
        L = 1024
        rows = -(-n // L)                # ceil
        n_padded = rows * L
        flat = jnp.pad(x.reshape(-1), (0, n_padded - n), constant_values=0.5)
        x2 = flat.reshape(rows, L)
        padded = True

    # Tile rows: <= rows_per_tile, sublane-aligned, and aim for >=2 grid steps
    # so v7x can split the "parallel" axis across its two TensorCores.
    half = -(-rows // 2)
    tm = min(rows_per_tile, _round_up(max(half, 1), sub))
    grid = (pl.cdiv(rows, tm),)

    out2 = pl.pallas_call(
        _isru_hf_kernel,
        out_shape=jax.ShapeDtypeStruct((rows, L), dtype),
        grid=grid,
        in_specs=[pl.BlockSpec((tm, L), lambda i: (i, 0))],
        out_specs=pl.BlockSpec((tm, L), lambda i: (i, 0)),
        compiler_params=pltpu.CompilerParams(
            dimension_semantics=("parallel",)),
    )(x2)

    if padded:
        return out2.reshape(-1)[:n].reshape(orig_shape)
    return out2.reshape(orig_shape)


def _reference(x):
    """Pure-JAX reference mirroring the PyTorch ISRU_Hf forward."""
    x = jnp.clip(x, _EPS, 1.0 - _EPS)
    u = 2.0 * x - 1.0
    return u / jnp.sqrt(1.0 - u * u + _EPS)


if __name__ == "__main__":
    # ISRU_Hf is applied elementwise to probability-like inputs in (0, 1).
    shape = (2, 4, 16, 16)

    key = jax.random.PRNGKey(0)
    x = jax.random.uniform(key, shape, dtype=jnp.float32,
                           minval=0.001, maxval=0.999)

    out = jax.block_until_ready(isru_hf(x))

    ref = _reference(x)
    assert out.shape == shape
    assert jnp.allclose(out, ref, atol=1e-5, rtol=1e-5), "mismatch vs reference"

    print("KERNEL_OK")
</pallas_src>

<mosaic_0001>
module attributes {stable_mosaic.version = 11 : i64} {
  func.func @_isru_hf_kernel(%arg0: i32, %arg1: memref<8x1024xf32, #tpu.memory_space<vmem>>, %arg2: memref<8x1024xf32, #tpu.memory_space<vmem>>) attributes {dimension_semantics = [#tpu.dimension_semantics<parallel>], iteration_bounds = array<i64: 1>, scalar_prefetch = 0 : i64, scratch_operands = 0 : i64, tpu.core_type = #tpu.core_type<tc>, window_params = [{transform_indices = @transform_0, window_bounds = array<i64: 8, 1024>}, {transform_indices = @transform_1, window_bounds = array<i64: 8, 1024>}]} {
    %c0 = arith.constant 0 : index
    %c0_0 = arith.constant 0 : index
    %0 = vector.load %arg1[%c0, %c0_0] : memref<8x1024xf32, #tpu.memory_space<vmem>>, vector<8x1024xf32>
    %cst = arith.constant 1.000000e-16 : f32
    %cst_1 = arith.constant 1.000000e+00 : f32
    %1 = vector.broadcast %cst : f32 to vector<8x1024xf32>
    %2 = arith.maximumf %1, %0 : vector<8x1024xf32>
    %3 = vector.broadcast %cst_1 : f32 to vector<8x1024xf32>
    %4 = arith.minimumf %3, %2 : vector<8x1024xf32>
    %cst_2 = arith.constant 2.000000e+00 : f32
    %5 = vector.broadcast %cst_2 : f32 to vector<8x1024xf32>
    %6 = arith.mulf %5, %4 : vector<8x1024xf32>
    %cst_3 = arith.constant 1.000000e+00 : f32
    %7 = vector.broadcast %cst_3 : f32 to vector<8x1024xf32>
    %8 = arith.subf %6, %7 : vector<8x1024xf32>
    %9 = arith.mulf %8, %8 : vector<8x1024xf32>
    %cst_4 = arith.constant 1.000000e+00 : f32
    %10 = vector.broadcast %cst_4 : f32 to vector<8x1024xf32>
    %11 = arith.subf %10, %9 : vector<8x1024xf32>
    %cst_5 = arith.constant 1.000000e-16 : f32
    %12 = vector.broadcast %cst_5 : f32 to vector<8x1024xf32>
    %13 = arith.addf %11, %12 : vector<8x1024xf32>
    %14 = math.rsqrt %13 : vector<8x1024xf32>
    %15 = arith.mulf %8, %14 : vector<8x1024xf32>
    %c0_6 = arith.constant 0 : index
    %c0_7 = arith.constant 0 : index
    %16 = vector.load %arg2[%c0_6, %c0_7] : memref<8x1024xf32, #tpu.memory_space<vmem>>, vector<8x1024xf32>
    tpu.vector_store %arg2[%c0_6, %c0_7], %15 {strides = array<i32>} : memref<8x1024xf32, #tpu.memory_space<vmem>>, vector<8x1024xf32>,
    return
  }
  func.func @transform_0(%arg0: i32) -> (i32, i32) {
    %c0_i32 = arith.constant 0 : i32
    %c0_i32_0 = arith.constant 0 : i32
    return %arg0, %c0_i32 : i32, i32
  }
  func.func @transform_1(%arg0: i32) -> (i32, i32) {
    %c0_i32 = arith.constant 0 : i32
    %c0_i32_0 = arith.constant 0 : i32
    return %arg0, %c0_i32 : i32, i32
  }
}

</mosaic_0001>

<llo_original>
// kernel: tpu_custom_call.1
$region0: #{tpu_custom_call.1}
  #allocation0 [shape = 'u32[]', space=smem, size = 0x4, offset = 0x4, fixed_abs, tag = 'smem constant byte address 0x4 - core index']
  #allocation1 [shape = 'u32[144,128]{1,0:T(1,128)}', space=vmem, size = 0x12000, scoped, tag = 'internal scratch']
  %s0 = inlined_call_operand.hbm [shape: f32[2,1024], index: 0, kind: input, shape index: {}]
  %s1 = inlined_call_operand.hbm [shape: f32[2,1024], index: 1, kind: output, shape index: {}]
  %s2 = sld [smem:[#allocation0]]
  $region18: #{tpu_custom_call.1} parent=0
    _
  %s4 = ssub.s32 1, %s2
  %s5 = scalar_select 0, %s4, %s2
  $region1: #{tpu_custom_call.1} parent=0
    #allocation2 [shape = 'u8[32768]{0}', space=vmem, size = 0x8000, scoped, tag = 'input window, operand 0, single buffered']
    #allocation3 [shape = 's32[1]{0}', space=sflag, size = 0x4, scoped, tag = 'scoped memory for tpu_custom_call.1']
    #allocation4 [shape = 's32[1]{0}', space=sflag, size = 0x4, scoped, tag = 'scoped memory for tpu_custom_call.1']
    #allocation5 [shape = 'u8[32768]{0}', space=vmem, size = 0x8000, scoped, tag = 'output window, operand 0, single buffered']
    %6 = vsyncpa [#allocation3], 0
    %7 = vsyncpa [#allocation4], 0
    // Predicated region
    $region2: #{tpu_custom_call.1} parent=1 // pred_check
      _
    $region3: #{tpu_custom_call.1} parent=1 // pred_check_branch
      %9 = sbr.rel (0) target = $region5
    $region4: #{tpu_custom_call.1} parent=1 // pred_region
      %s11 = ssub.s32 1024, 256
      %12 = vsyncadd [#allocation3], %s11
      %s13 = sshll.u32 [#allocation2], 4
      %s14 = int_to_ptr.vmem [resolvable:$true] %s13
      %19 = dma.hbm_to_vmem [thread:$0]  %s0, 256, %s14, [#allocation3], 256, 256, 16
    $region5: #{tpu_custom_call.1} parent=1 // pred_fallthru
      _
    // Predicated region
    $region6: #{tpu_custom_call.1} parent=1 // pred_check
      _
    $region7: #{tpu_custom_call.1} parent=1 // pred_check_branch
      %21 = sbr.rel (0) target = $region9
    $region8: #{tpu_custom_call.1} parent=1 // pred_region
      %22 = dma.done [#allocation3], 1024
    $region9: #{tpu_custom_call.1} parent=1 // pred_fallthru
      _
    %v23 = vld [vmem:[#allocation2] sm:$0xff]
    %v24 = vld [vmem:[#allocation2 + $0x8] sm:$0xff]
    %v25 = vld [vmem:[#allocation2 + $0x10] sm:$0xff]
    %v26 = vld [vmem:[#allocation2 + $0x18] sm:$0xff]
    %v27 = vld [vmem:[#allocation2 + $0x20] sm:$0xff]
    %v28 = vld [vmem:[#allocation2 + $0x28] sm:$0xff]
    %v29 = vld [vmem:[#allocation2 + $0x30] sm:$0xff]
    %v30 = vld [vmem:[#allocation2 + $0x38] sm:$0xff]
    %v31 = vmax.f32 %v23, 1e-16
    %v32 = vmax.f32 %v24, 1e-16
    %v33 = vmax.f32 %v25, 1e-16
    %v34 = vmax.f32 %v26, 1e-16
    %v35 = vmax.f32 %v27, 1e-16
    %v36 = vmax.f32 %v28, 1e-16
    %v37 = vmax.f32 %v29, 1e-16
    %v38 = vmax.f32 %v30, 1e-16
    %v39 = vmin.f32 %v31, 1.0
    %v40 = vmin.f32 %v32, 1.0
    %v41 = vmin.f32 %v33, 1.0
    %v42 = vmin.f32 %v34, 1.0
    %v43 = vmin.f32 %v35, 1.0
    %v44 = vmin.f32 %v36, 1.0
    %v45 = vmin.f32 %v37, 1.0
    %v46 = vmin.f32 %v38, 1.0
    %v47 = vmul.f32 %v39, 2.0
    %v48 = vmul.f32 %v40, 2.0
    %v49 = vmul.f32 %v41, 2.0
    %v50 = vmul.f32 %v42, 2.0
    %v51 = vmul.f32 %v43, 2.0
    %v52 = vmul.f32 %v44, 2.0
    %v53 = vmul.f32 %v45, 2.0
    %v54 = vmul.f32 %v46, 2.0
    %v55 = vsub.f32 %v47, 1.0
    %v56 = vsub.f32 %v48, 1.0
    %v57 = vsub.f32 %v49, 1.0
    %v58 = vsub.f32 %v50, 1.0
    %v59 = vsub.f32 %v51, 1.0
    %v60 = vsub.f32 %v52, 1.0
    %v61 = vsub.f32 %v53, 1.0
    %v62 = vsub.f32 %v54, 1.0
    %v63 = vmul.f32 %v55, %v55
    %v64 = vmul.f32 %v56, %v56
    %v65 = vmul.f32 %v57, %v57
    %v66 = vmul.f32 %v58, %v58
    %v67 = vmul.f32 %v59, %v59
    %v68 = vmul.f32 %v60, %v60
    %v69 = vmul.f32 %v61, %v61
    %v70 = vmul.f32 %v62, %v62
    %v71 = vsub.f32 1.0, %v63
    %v72 = vsub.f32 1.0, %v64
    %v73 = vsub.f32 1.0, %v65
    %v74 = vsub.f32 1.0, %v66
    %v75 = vsub.f32 1.0, %v67
    %v76 = vsub.f32 1.0, %v68
    %v77 = vsub.f32 1.0, %v69
    %v78 = vsub.f32 1.0, %v70
    %v79 = vadd.f32 %v71, 1e-16
    %v80 = vadd.f32 %v72, 1e-16
    %v81 = vadd.f32 %v73, 1e-16
    %v82 = vadd.f32 %v74, 1e-16
    %v83 = vadd.f32 %v75, 1e-16
    %v84 = vadd.f32 %v76, 1e-16
    %v85 = vadd.f32 %v77, 1e-16
    %v86 = vadd.f32 %v78, 1e-16
    %v87 = vrsqrt.pop %v79
    %v88 = vrsqrt.pop %v80
    %v89 = vrsqrt.pop %v81
    %v90 = vrsqrt.pop %v82
    %v91 = vrsqrt.pop %v83
    %v92 = vrsqrt.pop %v84
    %v93 = vrsqrt.pop %v85
    %v94 = vrsqrt.pop %v86
    %v95 = vmul.f32 %v55, %v87
    %v96 = vmul.f32 %v56, %v88
    %v97 = vmul.f32 %v57, %v89
    %v98 = vmul.f32 %v58, %v90
    %v99 = vmul.f32 %v59, %v91
    %v100 = vmul.f32 %v60, %v92
    %v101 = vmul.f32 %v61, %v93
    %v102 = vmul.f32 %v62, %v94
    %103 = vst [vmem:[#allocation5] sm:$0xff] %v95
    %104 = vst [vmem:[#allocation5 + $0x8] sm:$0xff] %v96
    %105 = vst [vmem:[#allocation5 + $0x10] sm:$0xff] %v97
    %106 = vst [vmem:[#allocation5 + $0x18] sm:$0xff] %v98
    %107 = vst [vmem:[#allocation5 + $0x20] sm:$0xff] %v99
    %108 = vst [vmem:[#allocation5 + $0x28] sm:$0xff] %v100
    %109 = vst [vmem:[#allocation5 + $0x30] sm:$0xff] %v101
    %110 = vst [vmem:[#allocation5 + $0x38] sm:$0xff] %v102
    // Predicated region
    $region10: #{tpu_custom_call.1} parent=1 // pred_check
      _
    $region11: #{tpu_custom_call.1} parent=1 // pred_check_branch
      %112 = sbr.rel (0) target = $region13
    $region12: #{tpu_custom_call.1} parent=1 // pred_region
      %s114 = ssub.s32 1024, 256
      %115 = vsyncadd [#allocation4], %s114
      %s116 = sshll.u32 [#allocation5], 4
      %s117 = int_to_ptr.vmem [resolvable:$true] %s116
      %122 = dma.vmem_to_hbm [thread:$0]  %s117, 256, %s1, [#allocation4], 256, 256, 16
    $region13: #{tpu_custom_call.1} parent=1 // pred_fallthru
      _
    // Predicated region
    $region14: #{tpu_custom_call.1} parent=1 // pred_check
      _
    $region15: #{tpu_custom_call.1} parent=1 // pred_check_branch
      %124 = sbr.rel (0) target = $region17
    $region16: #{tpu_custom_call.1} parent=1 // pred_region
      %125 = dma.done [#allocation4], 1024
    $region17: #{tpu_custom_call.1} parent=1 // pred_fallthru
      _
    %126 = vsyncpa [#allocation3], 1
    %127 = vsyncpa [#allocation4], 1

</llo_original>
